<compile_context>
chip_gen: v7x
topology: tpu7x:2x2x1
jax: 0.10.0
libtpu: 0.0.40
codegen_flags: <defaults>
</compile_context>

<pallas_src>
import functools

import jax
import jax.numpy as jnp
from jax import lax
from jax.experimental import pallas as pl
from jax.experimental.pallas import tpu as pltpu


def _probe_kernel(x_ref, w_ref, b_ref, o_ref, acc_ref, *, inv_seq, seq_len, ts):
    # x_ref: (tb, ts, D); w_ref: (D, Lp) f32; b_ref: (1, Lp) f32;
    # o_ref: (tb, Lp) f32; acc_ref: (tb, D) f32 scratch.
    j = pl.program_id(1)
    nj = pl.num_programs(1)

    @pl.when(j == 0)
    def _():
        acc_ref[...] = jnp.zeros_like(acc_ref)

    x = x_ref[...]
    rem = seq_len % ts
    if rem:  # static: the last seq tile is ragged -> zero its padded rows
        limit = jnp.where(j == nj - 1, rem, ts)
        row = lax.broadcasted_iota(jnp.int32, (1, ts, 1), 1)
        x = jnp.where(row < limit, x, jnp.zeros((), x.dtype))

    # f32 accumulation of the sequence sum.
    acc_ref[...] += jnp.sum(x, axis=1, dtype=jnp.float32)

    @pl.when(j == nj - 1)
    def _():
        mean = acc_ref[...] * jnp.float32(inv_seq)
        y = jnp.dot(mean, w_ref[...], preferred_element_type=jnp.float32)
        o_ref[...] = (y + b_ref[...]).astype(o_ref.dtype)


def _vmem_capacity_bytes():
    try:
        return int(pltpu.get_tpu_info().vmem_capacity_bytes)
    except Exception:
        return 64 << 20  # conservative (v7x-sized) fallback


def _round_down(n, m):
    return (n // m) * m


def _choose_tiles(B, S, D, Lp, x_itemsize):
    """Pick (tb, ts, vmem_limit_bytes) with full VMEM accounting."""
    # dtype-aware sublane alignment for the streamed x tile.
    sub = {1: 32, 2: 16}.get(x_itemsize, 8)

    vmem_cap = max(_vmem_capacity_bytes(), 32 << 20)
    # Leave headroom below physical VMEM for compiler-internal scratch:
    # ~54 MiB on 64 MiB parts (v7x), ~108 MiB on 128 MiB parts (v5e/v6e).
    vmem_limit = min(vmem_cap - (8 << 20), int(vmem_cap * 0.85))

    # Resident, tb/ts-independent bytes: W (charged at 2 buffers to stay safe
    # even without single-buffering), bias, misc/compiler reserve.
    fixed = 2 * D * Lp * 4 + Lp * 4 + (4 << 20)

    # x-tile budget. Past ~16 MiB per buffer the HBM stream is saturated
    # (measured ~85% of roofline already at few-MiB tiles); allow bigger tiles
    # on 128 MiB parts, stay tighter on 64 MiB parts.
    per_buf_cap = (16 << 20) if vmem_cap <= (64 << 20) else (32 << 20)
    budget = min(max(vmem_limit - fixed, 1 << 20), 2 * per_buf_cap)

    per_row_x = 2 * D * x_itemsize            # double-buffered x per (b, s) row
    per_brow_extra = D * 4 + 2 * Lp * 4       # f32 acc + double-buffered f32 out

    # Minimum batch tile that satisfies the (8,128) rule on the output block.
    tb_min = B if B <= 8 else 8

    # Sequence tile: as large as possible (aligned) with tb_min batch rows.
    avail = max(budget - tb_min * per_brow_extra, tb_min * per_row_x * sub)
    ts = min(S, max(sub, _round_down(avail // (tb_min * per_row_x), sub)))

    # Batch tile: fill the remaining budget; multiple of 8 or == B.
    tb = max(tb_min, budget // (ts * per_row_x + per_brow_extra))
    if tb >= B:
        tb = B
    else:
        tb = max(tb_min, _round_down(tb, 8))

    # Give v7x's two TensorCores >= 2 steps on the "parallel" batch axis when
    # the batch is big enough (costs one extra ~0.35us step elsewhere).
    if tb == B and B >= 16:
        tb = min(B, max(8, ((pl.cdiv(B, 2) + 7) // 8) * 8))

    return tb, ts, vmem_limit


@functools.partial(jax.jit,
                   static_argnames=("zero_features", "tile_batch", "tile_seq"))
def sentence_linear_label_probe(x, w, b, *, zero_features=False,
                                tile_batch=None, tile_seq=None):
    """x: (batch, seq, model_dim) -> f32 logits (batch, label_space_size).

    w is stored as (model_dim, label_space_size), i.e. torch weight.T.
    tile_batch / tile_seq are optional static overrides (testing).
    """
    B, S, D = x.shape
    L = w.shape[1]

    if zero_features:
        # mean -> zeros -> linear  ==  bias broadcast; skip the HBM stream.
        return jnp.broadcast_to(b.astype(jnp.float32)[None, :], (B, L))

    # Lane-dense output: pad the label dim up to a multiple of 128 (>= 128).
    Lp = max(128, ((L + 127) // 128) * 128)
    w_p = jnp.zeros((D, Lp), jnp.float32).at[:, :L].set(w.astype(jnp.float32))
    b_p = jnp.zeros((1, Lp), jnp.float32).at[0, :L].set(b.astype(jnp.float32))

    x_item = jnp.dtype(x.dtype).itemsize
    tb, ts, vmem_limit = _choose_tiles(B, S, D, Lp, x_item)
    if tile_batch is not None:
        tb = int(tile_batch)
    if tile_seq is not None:
        ts = int(tile_seq)

    grid = (pl.cdiv(B, tb), pl.cdiv(S, ts))

    cost = pl.CostEstimate(
        flops=int(B * S * D + 2 * B * D * Lp),
        transcendentals=0,
        bytes_accessed=int(B * S * D * x_item + D * Lp * 4 + Lp * 4 + B * Lp * 4),
    )

    out = pl.pallas_call(
        functools.partial(_probe_kernel, inv_seq=1.0 / S, seq_len=S, ts=ts),
        out_shape=jax.ShapeDtypeStruct((B, Lp), jnp.float32),
        grid_spec=pltpu.PrefetchScalarGridSpec(
            num_scalar_prefetch=0,
            grid=grid,
            in_specs=[
                pl.BlockSpec((tb, ts, D), lambda i, j: (i, j, 0)),   # x tile
                pl.BlockSpec((D, Lp), lambda i, j: (0, 0)),          # W (resident)
                pl.BlockSpec((1, Lp), lambda i, j: (0, 0)),          # bias
            ],
            out_specs=pl.BlockSpec((tb, Lp), lambda i, j: (i, 0)),
            scratch_shapes=[pltpu.VMEM((tb, D), jnp.float32)],
        ),
        compiler_params=pltpu.CompilerParams(
            dimension_semantics=("parallel", "arbitrary"),
            vmem_limit_bytes=int(vmem_limit),
        ),
        cost_estimate=cost,
    )(x, w_p, b_p)

    return out[:, :L]


def _reference(x, w, b, zero_features=False):
    m = jnp.mean(x.astype(jnp.float32), axis=1)
    if zero_features:
        m = jnp.zeros_like(m)
    return m @ w.astype(jnp.float32) + b.astype(jnp.float32)


# TODO(synk): self.linear2, nn.Dropout(p=0) and print_param_count are dead code
# in the PyTorch forward; intentionally not implemented.

if __name__ == "__main__":
    key = jax.random.PRNGKey(0)
    kx, kw, kb, kx2 = jax.random.split(key, 4)

    # 1) Small shapes consistent with the module's forward:
    #    batch=2, seq=8, model_dim=32, label_space_size=4.
    batch, seq, model_dim, label_space_size = 2, 8, 32, 4
    x = jax.random.normal(kx, (batch, seq, model_dim), dtype=jnp.float32)
    # Parameters stored as (in, out), i.e. torch weight.T, plus bias.
    w = jax.random.normal(kw, (model_dim, label_space_size), jnp.float32) * 0.05
    b = jax.random.normal(kb, (label_space_size,), jnp.float32) * 0.05

    out = jax.block_until_ready(sentence_linear_label_probe(x, w, b))
    ref = _reference(x, w, b)
    assert out.shape == (batch, label_space_size)
    assert jnp.allclose(out, ref, atol=1e-5, rtol=1e-5), "mismatch vs reference"

    # 2) zero_features path (short-circuited in the wrapper).
    out_z = jax.block_until_ready(
        sentence_linear_label_probe(x, w, b, zero_features=True))
    ref_z = _reference(x, w, b, zero_features=True)
    assert jnp.allclose(out_z, ref_z, atol=1e-5, rtol=1e-5), "zero_features mismatch"

    # 3) Non-divisor batch/seq with forced small tiles: exercises the cdiv
    #    grids, the in-kernel ragged-seq mask and the clamped batch writeback.
    B2, S2 = 10, 20
    x2 = jax.random.normal(kx2, (B2, S2, model_dim), dtype=jnp.float32)
    out2 = jax.block_until_ready(
        sentence_linear_label_probe(x2, w, b, tile_batch=8, tile_seq=8))
    ref2 = _reference(x2, w, b)
    assert out2.shape == (B2, label_space_size)
    assert jnp.allclose(out2, ref2, atol=1e-5, rtol=1e-5), "ragged-tile mismatch"

    print("KERNEL_OK")
</pallas_src>

<mosaic_0001>
module attributes {stable_mosaic.version = 11 : i64} {
  func.func @_probe_kernel(%arg0: i32, %arg1: i32, %arg2: memref<2x8x32xf32, #tpu.memory_space<vmem>>, %arg3: memref<32x128xf32, #tpu.memory_space<vmem>>, %arg4: memref<1x128xf32, #tpu.memory_space<vmem>>, %arg5: memref<2x128xf32, #tpu.memory_space<vmem>>, %arg6: memref<2x32xf32, #tpu.memory_space<vmem>>) attributes {dimension_semantics = [#tpu.dimension_semantics<parallel>, #tpu.dimension_semantics<arbitrary>], iteration_bounds = array<i64: 1, 1>, scalar_prefetch = 0 : i64, scratch_operands = 1 : i64, tpu.core_type = #tpu.core_type<tc>, window_params = [{transform_indices = @transform_0, window_bounds = array<i64: 2, 8, 32>}, {pipeline_mode = #tpu.pipeline_mode<synchronous>, transform_indices = @transform_1, window_bounds = array<i64: 32, 128>}, {pipeline_mode = #tpu.pipeline_mode<synchronous>, transform_indices = @transform_2, window_bounds = array<i64: 1, 128>}, {transform_indices = @transform_3, window_bounds = array<i64: 2, 128>}]} {
    %c0_i32 = arith.constant 0 : i32
    %0 = arith.cmpi eq, %arg1, %c0_i32 : i32
    %1 = arith.extui %0 : i1 to i32
    %c0_i32_0 = arith.constant 0 : i32
    %2 = arith.cmpi ne, %1, %c0_i32_0 : i32
    scf.if %2 {
      %cst_9 = arith.constant 0.000000e+00 : f32
      %11 = vector.broadcast %cst_9 : f32 to vector<2x32xf32>
      %c0_10 = arith.constant 0 : index
      %c0_11 = arith.constant 0 : index
      %12 = vector.load %arg6[%c0_10, %c0_11] : memref<2x32xf32, #tpu.memory_space<vmem>>, vector<2x32xf32>
      tpu.vector_store %arg6[%c0_10, %c0_11], %11 {strides = array<i32>} : memref<2x32xf32, #tpu.memory_space<vmem>>, vector<2x32xf32>,
    } else {
    }
    %c0 = arith.constant 0 : index
    %c0_1 = arith.constant 0 : index
    %c0_2 = arith.constant 0 : index
    %3 = vector.load %arg2[%c0, %c0_1, %c0_2] : memref<2x8x32xf32, #tpu.memory_space<vmem>>, vector<2x8x32xf32>
    %c0_3 = arith.constant 0 : index
    %c0_4 = arith.constant 0 : index
    %4 = vector.load %arg6[%c0_3, %c0_4] : memref<2x32xf32, #tpu.memory_space<vmem>>, vector<2x32xf32>
    %cst = arith.constant dense<0.000000e+00> : vector<2x32xf32>
    %5 = vector.multi_reduction <add>, %3, %cst [1] : vector<2x8x32xf32> to vector<2x32xf32>
    %6 = arith.addf %4, %5 : vector<2x32xf32>
    %c0_5 = arith.constant 0 : index
    %c0_6 = arith.constant 0 : index
    %7 = vector.load %arg6[%c0_5, %c0_6] : memref<2x32xf32, #tpu.memory_space<vmem>>, vector<2x32xf32>
    tpu.vector_store %arg6[%c0_5, %c0_6], %6 {strides = array<i32>} : memref<2x32xf32, #tpu.memory_space<vmem>>, vector<2x32xf32>,
    %c0_i32_7 = arith.constant 0 : i32
    %8 = arith.cmpi eq, %arg1, %c0_i32_7 : i32
    %9 = arith.extui %8 : i1 to i32
    %c0_i32_8 = arith.constant 0 : i32
    %10 = arith.cmpi ne, %9, %c0_i32_8 : i32
    scf.if %10 {
      %c0_9 = arith.constant 0 : index
      %c0_10 = arith.constant 0 : index
      %11 = vector.load %arg6[%c0_9, %c0_10] : memref<2x32xf32, #tpu.memory_space<vmem>>, vector<2x32xf32>
      %cst_11 = arith.constant 1.250000e-01 : f32
      %12 = vector.broadcast %cst_11 : f32 to vector<2x32xf32>
      %13 = arith.mulf %11, %12 : vector<2x32xf32>
      %c0_12 = arith.constant 0 : index
      %c0_13 = arith.constant 0 : index
      %14 = vector.load %arg3[%c0_12, %c0_13] : memref<32x128xf32, #tpu.memory_space<vmem>>, vector<32x128xf32>
      %cst_14 = arith.constant dense<0.000000e+00> : vector<2x128xf32>
      %15 = tpu.matmul %13, %14, %cst_14 {dimension_numbers = #tpu.dot_dimension_numbers<[1], [0], [0], [1], [0, 0, 1, 1], [], []>} : vector<2x32xf32>, vector<32x128xf32>, vector<2x128xf32> -> vector<2x128xf32>
      %c0_15 = arith.constant 0 : index
      %c0_16 = arith.constant 0 : index
      %16 = vector.load %arg4[%c0_15, %c0_16] : memref<1x128xf32, #tpu.memory_space<vmem>>, vector<1x128xf32>
      %17 = vector.broadcast %16 : vector<1x128xf32> to vector<2x128xf32>
      %18 = arith.addf %15, %17 : vector<2x128xf32>
      %c0_17 = arith.constant 0 : index
      %c0_18 = arith.constant 0 : index
      %19 = vector.load %arg5[%c0_17, %c0_18] : memref<2x128xf32, #tpu.memory_space<vmem>>, vector<2x128xf32>
      tpu.vector_store %arg5[%c0_17, %c0_18], %18 {strides = array<i32>} : memref<2x128xf32, #tpu.memory_space<vmem>>, vector<2x128xf32>,
    } else {
    }
    return
  }
  func.func @transform_0(%arg0: i32, %arg1: i32) -> (i32, i32, i32) {
    %c0_i32 = arith.constant 0 : i32
    %c0_i32_0 = arith.constant 0 : i32
    return %arg0, %arg1, %c0_i32 : i32, i32, i32
  }
  func.func @transform_1(%arg0: i32, %arg1: i32) -> (i32, i32) {
    %c0_i32 = arith.constant 0 : i32
    %c0_i32_0 = arith.constant 0 : i32
    %c0_i32_1 = arith.constant 0 : i32
    return %c0_i32, %c0_i32_0 : i32, i32
  }
  func.func @transform_2(%arg0: i32, %arg1: i32) -> (i32, i32) {
    %c0_i32 = arith.constant 0 : i32
    %c0_i32_0 = arith.constant 0 : i32
    %c0_i32_1 = arith.constant 0 : i32
    return %c0_i32, %c0_i32_0 : i32, i32
  }
  func.func @transform_3(%arg0: i32, %arg1: i32) -> (i32, i32) {
    %c0_i32 = arith.constant 0 : i32
    %c0_i32_0 = arith.constant 0 : i32
    return %arg0, %c0_i32 : i32, i32
  }
}

</mosaic_0001>

<llo_original>
// kernel: sentence_linear_label_probe.1
$region0: #{sentence_linear_label_probe.1}
  #allocation0 [shape = 'u32[]', space=smem, size = 0x4, offset = 0x4, fixed_abs, tag = 'smem constant byte address 0x4 - core index']
  #allocation1 [shape = 'u32[144,128]{1,0:T(1,128)}', space=vmem, size = 0x12000, scoped, tag = 'internal scratch']
  #allocation2 [shape = 'f32[2,32]{1,0:T(2,128)}', space=vmem, size = 0x400, scoped, tag = 'scratch operand']
  %s0 = inlined_call_operand.vmem [shape: f32[2,8,32], index: 0, kind: input, shape index: {}]
  %s1 = inlined_call_operand.vmem [shape: f32[32,128], index: 1, kind: input, shape index: {}]
  %s2 = inlined_call_operand.vmem [shape: f32[1,128], index: 2, kind: input, shape index: {}]
  %s3 = inlined_call_operand.hbm [shape: f32[2,128], index: 3, kind: output, shape index: {}]
  %s4 = sld [smem:[#allocation0]]
  $region30: #{sentence_linear_label_probe.1} parent=0
    _
  %s6 = ssub.s32 1, %s4
  %s7 = scalar_select 0, %s6, %s4
  $region1: #{sentence_linear_label_probe.1} parent=0
    #allocation3 [shape = 'u8[1024]{0}', space=vmem, size = 0x400, scoped, tag = 'output window, operand 0, single buffered']
    #allocation4 [shape = 's32[1]{0}', space=sflag, size = 0x4, scoped, tag = 'scoped memory for sentence_linear_label_probe.1']
    %8 = vsyncpa [#allocation4], 0
    // Predicated region
    $region2: #{sentence_linear_label_probe.1} parent=1 // pred_check
      _
    $region3: #{sentence_linear_label_probe.1} parent=1 // pred_check_branch
      %10 = sbr.rel (0) target = $region5
    $region4: #{sentence_linear_label_probe.1} parent=1 // pred_region
      _
    $region5: #{sentence_linear_label_probe.1} parent=1 // pred_fallthru
      _
    // Predicated region
    $region6: #{sentence_linear_label_probe.1} parent=1 // pred_check
      _
    $region7: #{sentence_linear_label_probe.1} parent=1 // pred_check_branch
      %12 = sbr.rel (0) target = $region9
    $region8: #{sentence_linear_label_probe.1} parent=1 // pred_region
      _
    $region9: #{sentence_linear_label_probe.1} parent=1 // pred_fallthru
      _
    // Predicated region
    $region10: #{sentence_linear_label_probe.1} parent=1 // pred_check
      _
    $region11: #{sentence_linear_label_probe.1} parent=1 // pred_check_branch
      %14 = sbr.rel (0) target = $region13
    $region12: #{sentence_linear_label_probe.1} parent=1 // pred_region
      _
    $region13: #{sentence_linear_label_probe.1} parent=1 // pred_fallthru
      _
    %p15 = scmp.eq.s32.totalorder 0, 0
    // Predicated region
    $region14: #{sentence_linear_label_probe.1} parent=1 // pred_check
      %p16 = pneg %p15
    $region15: #{sentence_linear_label_probe.1} parent=1 // pred_check_branch
      %18 = sbr.rel (%p16) target = $region17
    $region16: #{sentence_linear_label_probe.1} parent=1 // pred_region
      %vm19 = vcmask 254976
      %20 = vst.msk [vmem:[#allocation2] sm:$0x3] %vm19, 0.0
    $region17: #{sentence_linear_label_probe.1} parent=1 // pred_fallthru
      _
    %v21 = vld [vmem:[%s0] sm:$0xff]
    %v22 = vld [vmem:[%s0 + $0x8] sm:$0xff]
    %v23 = vld [vmem:[#allocation2] sm:$0x3]
    %vm24 = vcmask 261120
    %v25 = vsel %vm24, %v21, 0.0
    %v26 = vrot.slane %v25, 4
    %v27 = vadd.f32 %v25, %v26
    %v28 = vrot.slane %v27, 2
    %v29 = vadd.f32 %v27, %v28
    %v30 = vrot.slane %v29, 1
    %v31 = vadd.f32 %v29, %v30
    %v32 = vsel %vm24, %v22, 0.0
    %v33 = vrot.slane %v32, 4
    %v34 = vadd.f32 %v32, %v33
    %v35 = vrot.slane %v34, 2
    %v36 = vadd.f32 %v34, %v35
    %v37 = vrot.slane %v36, 1
    %v38 = vadd.f32 %v36, %v37
    %vm41 = vcmask 1041409
    %v42 = vsel %vm41, %v38, %v31
    %v44 = vadd.f32 %v23, %v42
    %vm45 = vcmask 254976
    %46 = vst.msk [vmem:[#allocation2] sm:$0x3] %vm45, %v44
    // Predicated region
    $region18: #{sentence_linear_label_probe.1} parent=1 // pred_check
      %p47 = pneg %p15
    $region19: #{sentence_linear_label_probe.1} parent=1 // pred_check_branch
      %49 = sbr.rel (%p47) target = $region21
    $region20: #{sentence_linear_label_probe.1} parent=1 // pred_region
      %v50 = vld [vmem:[#allocation2] sm:$0x3]
      %v51 = vmul.f32 %v50, 0.125
      %v52 = vld [vmem:[%s1] sm:$0xff]
      %v53 = vld [vmem:[%s1 + $0x8] sm:$0xff]
      %v54 = vld [vmem:[%s1 + $0x10] sm:$0xff]
      %v55 = vld [vmem:[%s1 + $0x18] sm:$0xff]
      %v56 = vld [vmem:[%s2] sm:$0x1]
      %v58 = vlaneseq
      %v59 = vshrl.u32 %v58, 7
      %v60 = vsub.s32 0, %v59
      %v61 = vrot.slane %v56, %v60
      %v64 = vsel %vm24, %v51, 0
      %66 = vmatprep.subr.mxu0 0.0
      %67 = vmatpush1.msra.mxu0 %v52
      %68 = vmatprep.subr.mxu0 0.0
      %69 = vmatpush1.msra.mxu0 %v53
      %70 = vmatprep.subr.mxu0 0.0
      %71 = vmatpush1.msra.mxu0 %v54
      %72 = vmatprep.subr.mxu0 0.0
      %73 = vmatpush1.msra.mxu0 %v55
      %74 = vmatprep.subr.mxu0 0.0
      %75 = vmatpush1.msra.mxu0 0.0
      %76 = vmatprep.subr.mxu0 0.0
      %77 = vmatpush1.msra.mxu0 0.0
      %78 = vmatprep.subr.mxu0 0.0
      %79 = vmatpush1.msra.mxu0 0.0
      %80 = vmatprep.subr.mxu0 0.0
      %81 = vmatpush1.msra.mxu0 0.0
      %82 = vmatprep.subr.mxu0 0.0
      %83 = vmatpush1.msra.mxu0 0.0
      %84 = vmatprep.subr.mxu0 0.0
      %85 = vmatpush1.msra.mxu0 0.0
      %86 = vmatprep.subr.mxu0 0.0
      %87 = vmatpush1.msra.mxu0 0.0
      %88 = vmatprep.subr.mxu0 0.0
      %89 = vmatpush1.msra.mxu0 0.0
      %90 = vmatprep.subr.mxu0 0.0
      %91 = vmatpush1.msra.mxu0 0.0
      %92 = vmatprep.subr.mxu0 0.0
      %93 = vmatpush1.msra.mxu0 0.0
      %94 = vmatprep.subr.mxu0 0.0
      %95 = vmatpush1.msra.mxu0 0.0
      %96 = vmatprep.subr.mxu0 0.0
      %97 = vmatpush1.msra.mxu0 0.0
      %98 = vmatprep.subr.mxu0 0.0
      %99 = vmatpush1.msra.mxu0 0.0
      %100 = vmatprep.subr.mxu0 0.0
      %101 = vmatpush1.msra.mxu0 0.0
      %102 = vmatprep.subr.mxu0 0.0
      %103 = vmatpush1.msra.mxu0 0.0
      %104 = vmatprep.subr.mxu0 0.0
      %105 = vmatpush1.msra.mxu0 0.0
      %106 = vmatprep.subr.mxu0 0.0
      %107 = vmatpush1.msra.mxu0 0.0
      %108 = vmatprep.subr.mxu0 0.0
      %109 = vmatpush1.msra.mxu0 0.0
      %110 = vmatprep.subr.mxu0 0.0
      %111 = vmatpush1.msra.mxu0 0.0
      %112 = vmatprep.subr.mxu0 0.0
      %113 = vmatpush1.msra.mxu0 0.0
      %114 = vmatprep.subr.mxu0 0.0
      %115 = vmatpush1.msra.mxu0 0.0
      %116 = vmatprep.subr.mxu0 0.0
      %117 = vmatpush1.msra.mxu0 0.0
      %118 = vmatprep.subr.mxu0 0.0
      %119 = vmatpush1.msra.mxu0 0.0
      %120 = vmatprep.subr.mxu0 0.0
      %121 = vmatpush1.msra.mxu0 0.0
      %122 = vmatprep.subr.mxu0 0.0
      %123 = vmatpush1.msra.mxu0 0.0
      %124 = vmatprep.subr.mxu0 0.0
      %125 = vmatpush1.msra.mxu0 0.0
      %126 = vmatprep.subr.mxu0 0.0
      %127 = vmatpush1.msra.mxu0 0.0
      %128 = vmatprep.subr.mxu0 0.0
      %129 = vmatpush1.msra.mxu0 0.0
      %130 = vmatprep.mubr.f32.mxu0 0.0
      %131 = vmatmul.mubr.f32.gmra.mrb[0].mxu0 %v64
      %v132 = vpop.f32.mrb[0].mxu0
      %v133 = vadd.f32 %v61, %v132
      %v134 = vpop.f32.mrb[0].mxu0
      %135 = vdwg.mxu0
      %136 = vst [vmem:[#allocation3] sm:$0x3] %v133
    $region21: #{sentence_linear_label_probe.1} parent=1 // pred_fallthru
      _
    // Predicated region
    $region22: #{sentence_linear_label_probe.1} parent=1 // pred_check
      _
    $region23: #{sentence_linear_label_probe.1} parent=1 // pred_check_branch
      %138 = sbr.rel (0) target = $region25
    $region24: #{sentence_linear_label_probe.1} parent=1 // pred_region
      %s140 = ssub.s32 32, 32
      %141 = vsyncadd [#allocation4], %s140
      %s143 = sshll.u32 [#allocation3], 4
      %s144 = int_to_ptr.vmem [resolvable:$true] %s143
      %146 = dma.vmem_to_hbm [thread:$0]  %s144, 32, %s3, [#allocation4]
    $region25: #{sentence_linear_label_probe.1} parent=1 // pred_fallthru
      _
    // Predicated region
    $region26: #{sentence_linear_label_probe.1} parent=1 // pred_check
      _
    $region27: #{sentence_linear_label_probe.1} parent=1 // pred_check_branch
      %148 = sbr.rel (0) target = $region29
    $region28: #{sentence_linear_label_probe.1} parent=1 // pred_region
      %149 = dma.done [#allocation4], 32
    $region29: #{sentence_linear_label_probe.1} parent=1 // pred_fallthru
      _
    %150 = vsyncpa [#allocation4], 1

</llo_original>
